<compile_context>
chip_gen: v7x
topology: tpu7x:2x2x1
jax: 0.10.0
libtpu: 0.0.40
codegen_flags: <defaults>
</compile_context>

<pallas_src>
import functools

import jax
import jax.numpy as jnp
from jax.experimental import pallas as pl
from jax.experimental.pallas import tpu as pltpu


def _round_up(n: int, m: int) -> int:
    return ((n + m - 1) // m) * m


def _mlp_kernel(x_ref, w1_ref, b1_ref, w2_ref, b2_ref, o_ref):
    # Cast activations to bf16 in-kernel (free VPU filler) instead of a
    # separate XLA pad/cast pass in the wrapper.
    x = x_ref[...].astype(jnp.bfloat16)
    # fc1: (TB, Kp)bf16 @ (Kp, Hp)bf16 -> f32 accumulate on the MXU.
    h = jnp.dot(x, w1_ref[...], preferred_element_type=jnp.float32)
    # bias + relu ride the VPU slots under the MXU.
    h = jnp.maximum(h + b1_ref[...], 0.0)
    # fc2: (TB, Hp)bf16 @ (Hp, Cp)bf16 -> f32 accumulate.
    out = jnp.dot(h.astype(jnp.bfloat16), w2_ref[...],
                  preferred_element_type=jnp.float32)
    out = out + b2_ref[...]
    # Lane-dense (TB, Cp = multiple of 128) bf16 store -> unmasked vst, half
    # the writeback bytes of f32.
    o_ref[...] = out.astype(o_ref.dtype)


def prepare_params(w1, b1, w2, b2):
    """One-time (init-time) weight prep: pad K/H/C to 128 lanes, cast to bf16.

    Weights are stored pre-transposed relative to torch.nn.Linear, i.e.
    w1: (input_size, hidden), w2: (hidden, num_classes).
    """
    input_size, hidden = w1.shape
    num_classes = w2.shape[1]
    kp = _round_up(input_size, 128)
    hp = _round_up(hidden, 128)
    cp = _round_up(num_classes, 128)
    w1_p = jnp.pad(w1, ((0, kp - input_size), (0, hp - hidden))).astype(jnp.bfloat16)
    b1_p = jnp.pad(b1, ((0, hp - hidden),)).reshape(1, hp).astype(jnp.float32)
    w2_p = jnp.pad(w2, ((0, hp - hidden), (0, cp - num_classes))).astype(jnp.bfloat16)
    b2_p = jnp.pad(b2, ((0, cp - num_classes),)).reshape(1, cp).astype(jnp.float32)
    return w1_p, b1_p, w2_p, b2_p


def _resident_spec(shape):
    # Constant index_map -> the block never changes; a single VMEM buffer is
    # enough.  Fall back to the default (double-buffered) spec if this Pallas
    # version does not expose pipeline_mode.
    try:
        return pl.BlockSpec(shape, lambda i: (0, 0), pipeline_mode=pl.Buffered(1))
    except TypeError:
        return pl.BlockSpec(shape, lambda i: (0, 0))


@functools.partial(jax.jit, static_argnames=("num_classes", "tb"))
def mlp_forward(x, w1_p, b1_p, w2_p, b2_p, *, num_classes: int, tb: int = 256):
    """x: (B, input_size) f32/bf16; padded params from prepare_params()."""
    batch, input_size = x.shape
    kp, hp = w1_p.shape
    cp = w2_p.shape[1]
    out_dtype = x.dtype

    # Pad the contraction dim only when the model's input_size isn't already
    # lane-aligned (no-op for input_size % 128 == 0).
    if kp != input_size:
        x = jnp.pad(x, ((0, 0), (0, kp - input_size)))

    # Batch tile: big enough to amortize per-grid-step overhead and fill the
    # 256-wide MXU on v6e/v7x, small enough to keep several tiles so v7x's two
    # TensorCores each get work (B=512, tb=256 -> grid=(2,)).
    tb_eff = min(tb, _round_up(batch, 8))
    batch_p = _round_up(batch, tb_eff)
    if batch_p != batch:
        x = jnp.pad(x, ((0, batch_p - batch), (0, 0)))
    n_tiles = batch_p // tb_eff

    out_p = pl.pallas_call(
        _mlp_kernel,
        out_shape=jax.ShapeDtypeStruct((batch_p, cp), jnp.bfloat16),
        grid_spec=pl.GridSpec(
            grid=(n_tiles,),
            in_specs=[
                pl.BlockSpec((tb_eff, kp), lambda i: (i, 0)),  # streamed batch tiles
                _resident_spec((kp, hp)),                      # VMEM-resident weights
                _resident_spec((1, hp)),
                _resident_spec((hp, cp)),
                _resident_spec((1, cp)),
            ],
            out_specs=pl.BlockSpec((tb_eff, cp), lambda i: (i, 0)),
        ),
        compiler_params=pltpu.CompilerParams(
            dimension_semantics=("parallel",),
        ),
    )(x, w1_p, b1_p, w2_p, b2_p)

    # Tiny fused slice + cast back to the caller's dtype (padded lanes are
    # inert because the padded weight rows/cols are zero).
    return out_p[:batch, :num_classes].astype(out_dtype)


def reference_forward(x, w1, b1, w2, b2):
    h = jnp.maximum(x @ w1 + b1, 0.0)
    return h @ w2 + b2


if __name__ == "__main__":
    # NeuralNetSinglePositionalArgument(input_size, hidden_size, num_classes)
    batch = 512
    input_size = 128
    hidden_size = 128
    num_classes = 16

    key = jax.random.PRNGKey(0)
    k_x, k_w1, k_b1, k_w2, k_b2 = jax.random.split(key, 5)

    x = jax.random.normal(k_x, (batch, input_size), dtype=jnp.float32)
    # torch.nn.Linear stores weight as (out, in); we keep the transposed
    # (in, out) layout so the kernel does row-major matmuls on the MXU.
    bound1 = 1.0 / (input_size ** 0.5)
    w1 = jax.random.uniform(k_w1, (input_size, hidden_size), jnp.float32,
                            -bound1, bound1)
    b1 = jax.random.uniform(k_b1, (hidden_size,), jnp.float32, -bound1, bound1)
    bound2 = 1.0 / (hidden_size ** 0.5)
    w2 = jax.random.uniform(k_w2, (hidden_size, num_classes), jnp.float32,
                            -bound2, bound2)
    b2 = jax.random.uniform(k_b2, (num_classes,), jnp.float32, -bound2, bound2)

    # Init-time weight padding/cast — amortized out of the per-forward path.
    params = jax.block_until_ready(prepare_params(w1, b1, w2, b2))

    out = mlp_forward(x, *params, num_classes=num_classes, tb=256)
    out = jax.block_until_ready(out)

    ref = reference_forward(x, w1, b1, w2, b2)
    assert out.shape == (batch, num_classes)
    assert out.dtype == x.dtype
    # bf16 operands / bf16 output with f32 accumulation vs. pure-f32 reference.
    assert jnp.allclose(out, ref, atol=5e-2, rtol=5e-2), (
        float(jnp.max(jnp.abs(out - ref))))
    print("KERNEL_OK")
</pallas_src>

<mosaic_0001>
module attributes {stable_mosaic.version = 11 : i64} {
  func.func @_mlp_kernel(%arg0: i32, %arg1: memref<256x128xf32, #tpu.memory_space<vmem>>, %arg2: memref<128x128xbf16, #tpu.memory_space<vmem>>, %arg3: memref<1x128xf32, #tpu.memory_space<vmem>>, %arg4: memref<128x128xbf16, #tpu.memory_space<vmem>>, %arg5: memref<1x128xf32, #tpu.memory_space<vmem>>, %arg6: memref<256x128xbf16, #tpu.memory_space<vmem>>) attributes {dimension_semantics = [#tpu.dimension_semantics<parallel>], iteration_bounds = array<i64: 2>, scalar_prefetch = 0 : i64, scratch_operands = 0 : i64, tpu.core_type = #tpu.core_type<tc>, window_params = [{transform_indices = @transform_0, window_bounds = array<i64: 256, 128>}, {pipeline_mode = #tpu.pipeline_mode<synchronous>, transform_indices = @transform_1, window_bounds = array<i64: 128, 128>}, {pipeline_mode = #tpu.pipeline_mode<synchronous>, transform_indices = @transform_2, window_bounds = array<i64: 1, 128>}, {pipeline_mode = #tpu.pipeline_mode<synchronous>, transform_indices = @transform_3, window_bounds = array<i64: 128, 128>}, {pipeline_mode = #tpu.pipeline_mode<synchronous>, transform_indices = @transform_4, window_bounds = array<i64: 1, 128>}, {transform_indices = @transform_5, window_bounds = array<i64: 256, 128>}]} {
    %c0 = arith.constant 0 : index
    %c0_0 = arith.constant 0 : index
    %0 = vector.load %arg1[%c0, %c0_0] : memref<256x128xf32, #tpu.memory_space<vmem>>, vector<256x128xf32>
    %1 = arith.truncf %0 : vector<256x128xf32> to vector<256x128xbf16>
    %c0_1 = arith.constant 0 : index
    %c0_2 = arith.constant 0 : index
    %2 = vector.load %arg2[%c0_1, %c0_2] : memref<128x128xbf16, #tpu.memory_space<vmem>>, vector<128x128xbf16>
    %cst = arith.constant dense<0.000000e+00> : vector<256x128xf32>
    %3 = tpu.matmul %1, %2, %cst {dimension_numbers = #tpu.dot_dimension_numbers<[1], [0], [0], [1], [0, 0, 1, 1], [], []>} : vector<256x128xbf16>, vector<128x128xbf16>, vector<256x128xf32> -> vector<256x128xf32>
    %c0_3 = arith.constant 0 : index
    %c0_4 = arith.constant 0 : index
    %4 = vector.load %arg3[%c0_3, %c0_4] : memref<1x128xf32, #tpu.memory_space<vmem>>, vector<1x128xf32>
    %5 = vector.broadcast %4 : vector<1x128xf32> to vector<256x128xf32>
    %6 = arith.addf %3, %5 : vector<256x128xf32>
    %cst_5 = arith.constant 0.000000e+00 : f32
    %7 = vector.broadcast %cst_5 : f32 to vector<256x128xf32>
    %8 = arith.maximumf %6, %7 : vector<256x128xf32>
    %9 = arith.truncf %8 : vector<256x128xf32> to vector<256x128xbf16>
    %c0_6 = arith.constant 0 : index
    %c0_7 = arith.constant 0 : index
    %10 = vector.load %arg4[%c0_6, %c0_7] : memref<128x128xbf16, #tpu.memory_space<vmem>>, vector<128x128xbf16>
    %cst_8 = arith.constant dense<0.000000e+00> : vector<256x128xf32>
    %11 = tpu.matmul %9, %10, %cst_8 {dimension_numbers = #tpu.dot_dimension_numbers<[1], [0], [0], [1], [0, 0, 1, 1], [], []>} : vector<256x128xbf16>, vector<128x128xbf16>, vector<256x128xf32> -> vector<256x128xf32>
    %c0_9 = arith.constant 0 : index
    %c0_10 = arith.constant 0 : index
    %12 = vector.load %arg5[%c0_9, %c0_10] : memref<1x128xf32, #tpu.memory_space<vmem>>, vector<1x128xf32>
    %13 = vector.broadcast %12 : vector<1x128xf32> to vector<256x128xf32>
    %14 = arith.addf %11, %13 : vector<256x128xf32>
    %15 = arith.truncf %14 : vector<256x128xf32> to vector<256x128xbf16>
    %c0_11 = arith.constant 0 : index
    %c0_12 = arith.constant 0 : index
    %16 = vector.load %arg6[%c0_11, %c0_12] : memref<256x128xbf16, #tpu.memory_space<vmem>>, vector<256x128xbf16>
    tpu.vector_store %arg6[%c0_11, %c0_12], %15 {strides = array<i32>} : memref<256x128xbf16, #tpu.memory_space<vmem>>, vector<256x128xbf16>,
    return
  }
  func.func @transform_0(%arg0: i32) -> (i32, i32) {
    %c0_i32 = arith.constant 0 : i32
    %c0_i32_0 = arith.constant 0 : i32
    return %arg0, %c0_i32 : i32, i32
  }
  func.func @transform_1(%arg0: i32) -> (i32, i32) {
    %c0_i32 = arith.constant 0 : i32
    %c0_i32_0 = arith.constant 0 : i32
    %c0_i32_1 = arith.constant 0 : i32
    return %c0_i32, %c0_i32_0 : i32, i32
  }
  func.func @transform_2(%arg0: i32) -> (i32, i32) {
    %c0_i32 = arith.constant 0 : i32
    %c0_i32_0 = arith.constant 0 : i32
    %c0_i32_1 = arith.constant 0 : i32
    return %c0_i32, %c0_i32_0 : i32, i32
  }
  func.func @transform_3(%arg0: i32) -> (i32, i32) {
    %c0_i32 = arith.constant 0 : i32
    %c0_i32_0 = arith.constant 0 : i32
    %c0_i32_1 = arith.constant 0 : i32
    return %c0_i32, %c0_i32_0 : i32, i32
  }
  func.func @transform_4(%arg0: i32) -> (i32, i32) {
    %c0_i32 = arith.constant 0 : i32
    %c0_i32_0 = arith.constant 0 : i32
    %c0_i32_1 = arith.constant 0 : i32
    return %c0_i32, %c0_i32_0 : i32, i32
  }
  func.func @transform_5(%arg0: i32) -> (i32, i32) {
    %c0_i32 = arith.constant 0 : i32
    %c0_i32_0 = arith.constant 0 : i32
    return %arg0, %c0_i32 : i32, i32
  }
}

</mosaic_0001>

<llo_original>
// kernel: mlp_forward.1
$region0: #{mlp_forward.1}
  #allocation0 [shape = 'u32[]', space=smem, size = 0x4, offset = 0x4, fixed_abs, tag = 'smem constant byte address 0x4 - core index']
  #allocation1 [shape = 'u32[144,128]{1,0:T(1,128)}', space=vmem, size = 0x12000, scoped, tag = 'internal scratch']
  %s0 = inlined_call_operand.hbm [shape: f32[512,128], index: 0, kind: input, shape index: {}]
  %s1 = inlined_call_operand.hbm [shape: bf16[128,128], index: 1, kind: input, shape index: {}]
  %s2 = inlined_call_operand.vmem [shape: f32[1,128], index: 2, kind: input, shape index: {}]
  %s3 = inlined_call_operand.hbm [shape: bf16[128,128], index: 3, kind: input, shape index: {}]
  %s4 = inlined_call_operand.vmem [shape: f32[1,128], index: 4, kind: input, shape index: {}]
  %s5 = inlined_call_operand.vmem [shape: bf16[512,128], index: 5, kind: output, shape index: {}]
  %s6 = sld [smem:[#allocation0]]
  $region65: #{mlp_forward.1} parent=0
    _
  %s8 = ssub.s32 1, %s6
  %s9 = scalar_select 0, %s8, %s6
  $region1: #{mlp_forward.1} parent=0
    #allocation2 [shape = 'u8[262144]{0}', space=vmem, size = 0x40000, scoped, tag = 'input window, operand 0']
    #allocation3 [shape = 's32[2]{0}', space=sflag, size = 0x8, scoped, tag = 'scoped memory for mlp_forward.1']
    #allocation4 [shape = 'u8[32768]{0}', space=vmem, size = 0x8000, scoped, tag = 'input window, operand 1, single buffered']
    #allocation5 [shape = 's32[1]{0}', space=sflag, size = 0x4, scoped, tag = 'scoped memory for mlp_forward.1']
    #allocation6 [shape = 'u8[32768]{0}', space=vmem, size = 0x8000, scoped, tag = 'input window, operand 3, single buffered']
    %10 = vsyncpa [#allocation3], 0
    %s11 = scalar_lea.sflag [#allocation3], 1
    %12 = vsyncpa %s11, 0
    %13 = vsyncpa [#allocation5], 0
    loop: start=0, step=1, limit=4
    $region2: #{mlp_forward.1} parent=1 // loop_pre_header
      _
    $region3: #{mlp_forward.1} parent=1 // loop_header
      %s15 = sphi 0, %s19
      %p16 = scmp.ge.s32.totalorder %s15, 4
      %s25 = sphi 0, %s27
      %s28 = sphi 0, %s25
      %s29 = sphi 0, %s28
      %s45 = sphi 0, %s29
      %s49 = sphi 0, %s49
      %s51 = sphi 0, %s49
      %s52 = sphi 0, %s51
      %s66 = sphi 0, %s52
      %s70 = sphi 0, %s70
      %s72 = sphi 0, %s70
      %s73 = sphi 0, %s72
      %s87 = sphi 0, %s73
      %s91 = sphi 0, %s91
      %s93 = sphi 0, %s91
      %s94 = sphi 0, %s93
      %s108 = sphi 0, %s94
      %s112 = sphi 0, %s112
      %s114 = sphi 0, %s112
      %s115 = sphi 0, %s114
      %s129 = sphi 0, %s115
      %s135 = sphi 0, %s137
      %s138 = sphi 0, %s135
      %s139 = sphi 0, %s138
      %s155 = sphi 0, %s139
    $region4: #{mlp_forward.1} parent=1 // loop_header_branch
      %18 = sbr.rel (%p16) target = $region8
    $region5: #{mlp_forward.1} parent=1 // loop_body
      %s20 = ssub.s32 %s15, 1
      %s21 = ssub.s32 %s15, 2
      %s22 = sadd.s32 %s15, 1
      %s23 = ssub.s32 %s15, %s22
      %p24 = scmp.eq.s32.totalorder %s23, 0
      %s26 = sadd.s32 %s25, 1
      %s27 = scalar_select %p24, %s25, %s26
      %p30 = pneg %p24
      %p31 = scmp.eq.s32.totalorder %s15, 1
      %p32 = por %p30, %p31
      %p33 = scmp.ne.s32.totalorder %s25, %s28
      %p34 = scmp.eq.s32.totalorder %s15, 0
      %p35 = por %p33, %p34
      %p36 = scmp.ne.s32.totalorder %s25, %s28
      %p37 = scmp.eq.s32.totalorder %s20, 1
      %p38 = por %p36, %p37
      %p39 = scmp.ne.s32.totalorder %s28, %s29
      %p40 = scmp.eq.s32.totalorder %s20, 0
      %p41 = por %p39, %p40
      %p42 = scmp.ne.s32.totalorder %s28, %s29
      %p43 = scmp.eq.s32.totalorder %s21, 1
      %p44 = por %p42, %p43
      %p46 = scmp.ne.s32.totalorder %s29, %s45
      %p47 = scmp.eq.s32.totalorder %s21, 0
      %p48 = por %p46, %p47
      %s50 = sadd.s32 %s49, 1
      %p53 = scmp.eq.s32.totalorder %s15, 1
      %p54 = scmp.ne.s32.totalorder %s49, %s51
      %p55 = scmp.eq.s32.totalorder %s15, 0
      %p56 = por %p54, %p55
      %p57 = scmp.ne.s32.totalorder %s49, %s51
      %p58 = scmp.eq.s32.totalorder %s20, 1
      %p59 = por %p57, %p58
      %p60 = scmp.ne.s32.totalorder %s51, %s52
      %p61 = scmp.eq.s32.totalorder %s20, 0
      %p62 = por %p60, %p61
      %p63 = scmp.ne.s32.totalorder %s51, %s52
      %p64 = scmp.eq.s32.totalorder %s21, 1
      %p65 = por %p63, %p64
      %p67 = scmp.ne.s32.totalorder %s52, %s66
      %p68 = scmp.eq.s32.totalorder %s21, 0
      %p69 = por %p67, %p68
      %s71 = sadd.s32 %s70, 1
      %p74 = scmp.eq.s32.totalorder %s15, 1
      %p75 = scmp.ne.s32.totalorder %s70, %s72
      %p76 = scmp.eq.s32.totalorder %s15, 0
      %p77 = por %p75, %p76
      %p78 = scmp.ne.s32.totalorder %s70, %s72
      %p79 = scmp.eq.s32.totalorder %s20, 1
      %p80 = por %p78, %p79
      %p81 = scmp.ne.s32.totalorder %s72, %s73
      %p82 = scmp.eq.s32.totalorder %s20, 0
      %p83 = por %p81, %p82
      %p84 = scmp.ne.s32.totalorder %s72, %s73
      %p85 = scmp.eq.s32.totalorder %s21, 1
      %p86 = por %p84, %p85
      %p88 = scmp.ne.s32.totalorder %s73, %s87
      %p89 = scmp.eq.s32.totalorder %s21, 0
      %p90 = por %p88, %p89
      %s92 = sadd.s32 %s91, 1
      %p95 = scmp.eq.s32.totalorder %s15, 1
      %p96 = scmp.ne.s32.totalorder %s91, %s93
      %p97 = scmp.eq.s32.totalorder %s15, 0
      %p98 = por %p96, %p97
      %p99 = scmp.ne.s32.totalorder %s91, %s93
      %p100 = scmp.eq.s32.totalorder %s20, 1
      %p101 = por %p99, %p100
      %p102 = scmp.ne.s32.totalorder %s93, %s94
      %p103 = scmp.eq.s32.totalorder %s20, 0
      %p104 = por %p102, %p103
      %p105 = scmp.ne.s32.totalorder %s93, %s94
      %p106 = scmp.eq.s32.totalorder %s21, 1
      %p107 = por %p105, %p106
      %p109 = scmp.ne.s32.totalorder %s94, %s108
      %p110 = scmp.eq.s32.totalorder %s21, 0
      %p111 = por %p109, %p110
      %s113 = sadd.s32 %s112, 1
      %p116 = scmp.eq.s32.totalorder %s15, 1
      %p117 = scmp.ne.s32.totalorder %s112, %s114
      %p118 = scmp.eq.s32.totalorder %s15, 0
      %p119 = por %p117, %p118
      %p120 = scmp.ne.s32.totalorder %s112, %s114
      %p121 = scmp.eq.s32.totalorder %s20, 1
      %p122 = por %p120, %p121
      %p123 = scmp.ne.s32.totalorder %s114, %s115
      %p124 = scmp.eq.s32.totalorder %s20, 0
      %p125 = por %p123, %p124
      %p126 = scmp.ne.s32.totalorder %s114, %s115
      %p127 = scmp.eq.s32.totalorder %s21, 1
      %p128 = por %p126, %p127
      %p130 = scmp.ne.s32.totalorder %s115, %s129
      %p131 = scmp.eq.s32.totalorder %s21, 0
      %p132 = por %p130, %p131
      %s133 = ssub.s32 %s15, %s22
      %p134 = scmp.eq.s32.totalorder %s133, 0
      %s136 = sadd.s32 %s135, 1
      %s137 = scalar_select %p134, %s135, %s136
      %p140 = pneg %p134
      %p141 = scmp.eq.s32.totalorder %s15, 1
      %p142 = por %p140, %p141
      %p143 = scmp.ne.s32.totalorder %s135, %s138
      %p144 = scmp.eq.s32.totalorder %s15, 0
      %p145 = por %p143, %p144
      %p146 = scmp.ne.s32.totalorder %s135, %s138
      %p147 = scmp.eq.s32.totalorder %s20, 1
      %p148 = por %p146, %p147
      %p149 = scmp.ne.s32.totalorder %s138, %s139
      %p150 = scmp.eq.s32.totalorder %s20, 0
      %p151 = por %p149, %p150
      %p152 = scmp.ne.s32.totalorder %s138, %s139
      %p153 = scmp.eq.s32.totalorder %s21, 1
      %p154 = por %p152, %p153
      %p156 = scmp.ne.s32.totalorder %s139, %s155
      %p157 = scmp.eq.s32.totalorder %s21, 0
      %p158 = por %p156, %p157
      %p159 = scmp.le.s32.totalorder 1, %s15
      %p160 = scmp.lt.s32.totalorder %s15, 3
      %p161 = pnand %p159, %p160
      %p162 = pneg %p161
      // Predicated region
      $region9: #{mlp_forward.1} parent=5 // pred_check
        _
      $region10: #{mlp_forward.1} parent=5 // pred_check_branch
        %164 = sbr.rel (%p161) target = $region12
      $region11: #{mlp_forward.1} parent=5 // pred_region
        %s165 = ssub.s32 %s15, 1
        // Predicated region
        $region13: #{mlp_forward.1} parent=11 // pred_check
          %p166 = pneg %p62
        $region14: #{mlp_forward.1} parent=11 // pred_check_branch
          %168 = sbr.rel (%p166) target = $region16
        $region15: #{mlp_forward.1} parent=11 // pred_region
          %s170 = ssub.s32 1024, 1024
          %171 = vsyncadd [#allocation5], %s170
          %s172 = sshll.u32 [#allocation4], 4
          %s173 = int_to_ptr.vmem [resolvable:$true] %s172
          %178 = dma.hbm_to_vmem [thread:$0]  %s1, 1024, %s173, [#allocation5], 64, 64, 4
        $region16: #{mlp_forward.1} parent=11 // pred_fallthru
          _
        // Predicated region
        $region17: #{mlp_forward.1} parent=11 // pred_check
          %p179 = pneg %p83
        $region18: #{mlp_forward.1} parent=11 // pred_check_branch
          %181 = sbr.rel (%p179) target = $region20
        $region19: #{mlp_forward.1} parent=11 // pred_region
          _
        $region20: #{mlp_forward.1} parent=11 // pred_fallthru
          _
        // Predicated region
        $region21: #{mlp_forward.1} parent=11 // pred_check
          %p182 = pneg %p104
        $region22: #{mlp_forward.1} parent=11 // pred_check_branch
          %184 = sbr.rel (%p182) target = $region24
        $region23: #{mlp_forward.1} parent=11 // pred_region
          %s186 = ssub.s32 1024, 1024
          %187 = vsyncadd [#allocation5], %s186
          %s188 = sshll.u32 [#allocation6], 4
          %s189 = int_to_ptr.vmem [resolvable:$true] %s188
          %194 = dma.hbm_to_vmem [thread:$0]  %s3, 1024, %s189, [#allocation5], 64, 64, 4
        $region24: #{mlp_forward.1} parent=11 // pred_fallthru
          _
        // Predicated region
        $region25: #{mlp_forward.1} parent=11 // pred_check
          %p195 = pneg %p125
        $region26: #{mlp_forward.1} parent=11 // pred_check_branch
          %197 = sbr.rel (%p195) target = $region28
        $region27: #{mlp_forward.1} parent=11 // pred_region
          _
        $region28: #{mlp_forward.1} parent=11 // pred_fallthru
          _
      $region12: #{mlp_forward.1} parent=5 // pred_fallthru
        _
      %p198 = scmp.lt.s32.totalorder %s15, 2
      // Predicated region
      $region29: #{mlp_forward.1} parent=5 // pred_check
        %p199 = pneg %p198
      $region30: #{mlp_forward.1} parent=5 // pred_check_branch
        %201 = sbr.rel (%p199) target = $region32
      $region31: #{mlp_forward.1} parent=5 // pred_region
        // Predicated region
        $region33: #{mlp_forward.1} parent=31 // pred_check
          %p202 = pneg %p35
        $region34: #{mlp_forward.1} parent=31 // pred_check_branch
          %204 = sbr.rel (%p202) target = $region36
        $region35: #{mlp_forward.1} parent=31 // pred_region
          %s205 = sand.u32 %s25, 1
          %s206 = scalar_lea.sflag [#allocation3], %s205
          %s207 = sand.u32 %s25, 1
          %s208 = smul.addr %s207, 256
          %s209 = scalar_lea.vmem [#allocation2], %s208
          %s210 = smul.u32 32, %s15
          %s212 = ssub.s32 4096, 4096
          %213 = vsyncadd %s206, %s212
          %s214 = smul.addr %s210, 128
          %s215 = scalar_lea.hbm %s0, %s214
          %s216 = sshll.u32 %s209, 4
          %s217 = int_to_ptr.vmem [resolvable:$true] %s216
          %222 = dma.hbm_to_vmem [thread:$0]  %s215, 4096, %s217, %s206, 128, 128, 8
        $region36: #{mlp_forward.1} parent=31 // pred_fallthru
          _
      $region32: #{mlp_forward.1} parent=5 // pred_fallthru
        _
      %p223 = scmp.le.s32.totalorder 1, %s15
      %p224 = scmp.lt.s32.totalorder %s15, 3
      %p225 = pnand %p223, %p224
      %p226 = pneg %p225
      // Predicated region
      $region37: #{mlp_forward.1} parent=5 // pred_check
        _
      $region38: #{mlp_forward.1} parent=5 // pred_check_branch
        %228 = sbr.rel (%p225) target = $region40
      $region39: #{mlp_forward.1} parent=5 // pred_region
        %s229 = ssub.s32 %s15, 1
        %s230 = sand.u32 %s28, 1
        %s231 = scalar_lea.sflag [#allocation3], %s230
        %s232 = sand.u32 %s28, 1
        %s233 = smul.addr %s232, 256
        %s234 = scalar_lea.vmem [#allocation2], %s233
        // Predicated region
        $region41: #{mlp_forward.1} parent=39 // pred_check
          %p235 = pneg %p41
        $region42: #{mlp_forward.1} parent=39 // pred_check_branch
          %237 = sbr.rel (%p235) target = $region44
        $region43: #{mlp_forward.1} parent=39 // pred_region
          %238 = dma.done %s231, 4096
        $region44: #{mlp_forward.1} parent=39 // pred_fallthru
          _
        // Predicated region
        $region45: #{mlp_forward.1} parent=39 // pred_check
          %p239 = pneg %p62
        $region46: #{mlp_forward.1} parent=39 // pred_check_branch
          %241 = sbr.rel (%p239) target = $region48
        $region47: #{mlp_forward.1} parent=39 // pred_region
          %242 = dma.done [#allocation5], 1024
        $region48: #{mlp_forward.1} parent=39 // pred_fallthru
          _
        // Predicated region
        $region49: #{mlp_forward.1} parent=39 // pred_check
          %p243 = pneg %p104
        $region50: #{mlp_forward.1} parent=39 // pred_check_branch
          %245 = sbr.rel (%p243) target = $region52
        $region51: #{mlp_forward.1} parent=39 // pred_region
          %246 = dma.done [#allocation5], 1024
        $region52: #{mlp_forward.1} parent=39 // pred_fallthru
          _
        %s247 = sand.u32 %s28, 1
        %s248 = scalar_lea.sflag [#allocation3], %s247
        %s249 = sand.u32 %s28, 1
        %s250 = smul.addr %s249, 256
        %s251 = scalar_lea.vmem [#allocation2], %s250
        %p252 = pneg %p41
        %p253 = pneg %p38
        %p254 = pneg %p62
        %p255 = pneg %p59
        %p256 = pneg %p83
        %p257 = pneg %p80
        %p258 = pneg %p104
        %p259 = pneg %p101
        %p260 = pneg %p125
        %p261 = pneg %p122
        %p262 = pneg %p151
        %p263 = pneg %p148
        %s264 = smul.u32 32, %s20
        %p265 = scmp.lt.s32.totalorder %s264, 63
        %s266 = scalar_select %p265, %s264, 63
        %s267 = smul.addr %s266, 4
        %s268 = scalar_lea.vmem %s5, %s267
        %s269 = smul.u32 32, %s20
        %s270 = smul.u32 32, %s20
        %p271 = scmp.lt.s32.totalorder %s270, 63
        %s272 = scalar_select %p271, %s270, 63
        %s273 = smul.addr %s272, 4
        %s274 = scalar_lea.vmem %s5, %s273
        %s275 = smul.u32 32, %s20
        %v277 = vld [vmem:[%s234] sm:$0xff]
        %v278 = vld [vmem:[%s234 + $0x8] sm:$0xff]
        %v279 = vld [vmem:[%s234 + $0x10] sm:$0xff]
        %v280 = vld [vmem:[%s234 + $0x18] sm:$0xff]
        %v281 = vld [vmem:[%s234 + $0x20] sm:$0xff]
        %v282 = vld [vmem:[%s234 + $0x28] sm:$0xff]
        %v283 = vld [vmem:[%s234 + $0x30] sm:$0xff]
        %v284 = vld [vmem:[%s234 + $0x38] sm:$0xff]
        %v285 = vld [vmem:[%s234 + $0x40] sm:$0xff]
        %v286 = vld [vmem:[%s234 + $0x48] sm:$0xff]
        %v287 = vld [vmem:[%s234 + $0x50] sm:$0xff]
        %v288 = vld [vmem:[%s234 + $0x58] sm:$0xff]
        %v289 = vld [vmem:[%s234 + $0x60] sm:$0xff]
        %v290 = vld [vmem:[%s234 + $0x68] sm:$0xff]
        %v291 = vld [vmem:[%s234 + $0x70] sm:$0xff]
        %v292 = vld [vmem:[%s234 + $0x78] sm:$0xff]
        %v293 = vld [vmem:[%s234 + $0x80] sm:$0xff]
        %v294 = vld [vmem:[%s234 + $0x88] sm:$0xff]
        %v295 = vld [vmem:[%s234 + $0x90] sm:$0xff]
        %v296 = vld [vmem:[%s234 + $0x98] sm:$0xff]
        %v297 = vld [vmem:[%s234 + $0xa0] sm:$0xff]
        %v298 = vld [vmem:[%s234 + $0xa8] sm:$0xff]
        %v299 = vld [vmem:[%s234 + $0xb0] sm:$0xff]
        %v300 = vld [vmem:[%s234 + $0xb8] sm:$0xff]
        %v301 = vld [vmem:[%s234 + $0xc0] sm:$0xff]
        %v302 = vld [vmem:[%s234 + $0xc8] sm:$0xff]
        %v303 = vld [vmem:[%s234 + $0xd0] sm:$0xff]
        %v304 = vld [vmem:[%s234 + $0xd8] sm:$0xff]
        %v305 = vld [vmem:[%s234 + $0xe0] sm:$0xff]
        %v306 = vld [vmem:[%s234 + $0xe8] sm:$0xff]
        %v307 = vld [vmem:[%s234 + $0xf0] sm:$0xff]
        %v308 = vld [vmem:[%s234 + $0xf8] sm:$0xff]
        %v309 = vpack.c.bf16 %v278, %v277
        %v310 = vpack.c.bf16 %v280, %v279
        %v311 = vpack.c.bf16 %v282, %v281
        %v312 = vpack.c.bf16 %v284, %v283
        %v313 = vpack.c.bf16 %v286, %v285
        %v314 = vpack.c.bf16 %v288, %v287
        %v315 = vpack.c.bf16 %v290, %v289
        %v316 = vpack.c.bf16 %v292, %v291
        %v317 = vpack.c.bf16 %v294, %v293
        %v318 = vpack.c.bf16 %v296, %v295
        %v319 = vpack.c.bf16 %v298, %v297
        %v320 = vpack.c.bf16 %v300, %v299
        %v321 = vpack.c.bf16 %v302, %v301
        %v322 = vpack.c.bf16 %v304, %v303
        %v323 = vpack.c.bf16 %v306, %v305
        %v324 = vpack.c.bf16 %v308, %v307
        %v325 = vld [vmem:[#allocation4] sm:$0xf]
        %v326 = vld [vmem:[#allocation4 + $0x4] sm:$0xf]
        %v327 = vld [vmem:[#allocation4 + $0x8] sm:$0xf]
        %v328 = vld [vmem:[#allocation4 + $0xc] sm:$0xf]
        %v329 = vld [vmem:[#allocation4 + $0x10] sm:$0xf]
        %v330 = vld [vmem:[#allocation4 + $0x14] sm:$0xf]
        %v331 = vld [vmem:[#allocation4 + $0x18] sm:$0xf]
        %v332 = vld [vmem:[#allocation4 + $0x1c] sm:$0xf]
        %v333 = vld [vmem:[#allocation4 + $0x20] sm:$0xf]
        %v334 = vld [vmem:[#allocation4 + $0x24] sm:$0xf]
        %v335 = vld [vmem:[#allocation4 + $0x28] sm:$0xf]
        %v336 = vld [vmem:[#allocation4 + $0x2c] sm:$0xf]
        %v337 = vld [vmem:[#allocation4 + $0x30] sm:$0xf]
        %v338 = vld [vmem:[#allocation4 + $0x34] sm:$0xf]
        %v339 = vld [vmem:[#allocation4 + $0x38] sm:$0xf]
        %v340 = vld [vmem:[#allocation4 + $0x3c] sm:$0xf]
        %v341 = vld [vmem:[%s2] sm:$0x1]
        %v343 = vlaneseq
        %v344 = vshrl.u32 %v343, 7
        %v345 = vsub.s32 0, %v344
        %v346 = vrot.slane %v341, %v345
        %v364 = vunpack.c.l.b16 %v325
        %v365 = vunpack.c.l.b16 %v326
        %v366 = vunpack.c.l.b16 %v327
        %v367 = vunpack.c.l.b16 %v328
        %v368 = vunpack.c.l.b16 %v329
        %v369 = vunpack.c.l.b16 %v330
        %v370 = vunpack.c.l.b16 %v331
        %v371 = vunpack.c.l.b16 %v332
        %v372 = vunpack.c.l.b16 %v333
        %v373 = vunpack.c.l.b16 %v334
        %v374 = vunpack.c.l.b16 %v335
        %v375 = vunpack.c.l.b16 %v336
        %v376 = vunpack.c.l.b16 %v337
        %v377 = vunpack.c.l.b16 %v338
        %v378 = vunpack.c.l.b16 %v339
        %v379 = vunpack.c.l.b16 %v340
        %v380 = vpack.c.b16 %v365, %v364
        %v381 = vpack.c.b16 %v367, %v366
        %v382 = vpack.c.b16 %v369, %v368
        %v383 = vpack.c.b16 %v371, %v370
        %v384 = vpack.c.b16 %v373, %v372
        %v385 = vpack.c.b16 %v375, %v374
        %v386 = vpack.c.b16 %v377, %v376
        %v387 = vpack.c.b16 %v379, %v378
        %396 = vmatprep.subr.bf16.mxu0 0
        %397 = vmatpush1.bf16.msra.mxu0 %v380
        %398 = vmatprep.subr.bf16.mxu0 0
        %399 = vmatpush1.bf16.msra.mxu0 %v381
        %400 = vmatprep.subr.bf16.mxu0 0
        %401 = vmatpush1.bf16.msra.mxu0 %v382
        %402 = vmatprep.subr.bf16.mxu0 0
        %403 = vmatpush1.bf16.msra.mxu0 %v383
        %404 = vmatprep.subr.bf16.mxu0 0
        %405 = vmatpush1.bf16.msra.mxu0 %v384
        %406 = vmatprep.subr.bf16.mxu0 0
        %407 = vmatpush1.bf16.msra.mxu0 %v385
        %408 = vmatprep.subr.bf16.mxu0 0
        %409 = vmatpush1.bf16.msra.mxu0 %v386
        %410 = vmatprep.subr.bf16.mxu0 0
        %411 = vmatpush1.bf16.msra.mxu0 %v387
        %412 = vmatprep.subr.bf16.mxu0 0
        %413 = vmatpush1.bf16.msra.mxu0 0
        %414 = vmatprep.subr.bf16.mxu0 0
        %415 = vmatpush1.bf16.msra.mxu0 0
        %416 = vmatprep.subr.bf16.mxu0 0
        %417 = vmatpush1.bf16.msra.mxu0 0
        %418 = vmatprep.subr.bf16.mxu0 0
        %419 = vmatpush1.bf16.msra.mxu0 0
        %420 = vmatprep.subr.bf16.mxu0 0
        %421 = vmatpush1.bf16.msra.mxu0 0
        %422 = vmatprep.subr.bf16.mxu0 0
        %423 = vmatpush1.bf16.msra.mxu0 0
        %424 = vmatprep.subr.bf16.mxu0 0
        %425 = vmatpush1.bf16.msra.mxu0 0
        %426 = vmatprep.subr.bf16.mxu0 0
        %427 = vmatpush1.bf16.msra.mxu0 0
        %428 = vmatprep.mubr.bf16.mxu0 0
        %429 = vmatmul.mubr.bf16.gmra.mrb[0].mxu0 %v309
        %v430 = vpop.f32.mrb[0].mxu0
        %v431 = vadd.f32 %v346, %v430
        %v432 = vpop.f32.mrb[0].mxu0
        %v433 = vpop.f32.mrb[0].mxu0
        %v434 = vadd.f32 %v346, %v433
        %v435 = vpop.f32.mrb[0].mxu0
        %436 = vmatprep.mubr.bf16.mxu0 0
        %437 = vmatmul.mubr.bf16.gmra.mrb[0].mxu0 %v310
        %v438 = vpop.f32.mrb[0].mxu0
        %v439 = vadd.f32 %v346, %v438
        %v440 = vpop.f32.mrb[0].mxu0
        %v441 = vpop.f32.mrb[0].mxu0
        %v442 = vadd.f32 %v346, %v441
        %v443 = vpop.f32.mrb[0].mxu0
        %444 = vmatprep.mubr.bf16.mxu0 0
        %445 = vmatmul.mubr.bf16.gmra.mrb[0].mxu0 %v311
        %v446 = vpop.f32.mrb[0].mxu0
        %v447 = vadd.f32 %v346, %v446
        %v448 = vpop.f32.mrb[0].mxu0
        %v449 = vpop.f32.mrb[0].mxu0
        %v450 = vadd.f32 %v346, %v449
        %v451 = vpop.f32.mrb[0].mxu0
        %452 = vmatprep.mubr.bf16.mxu0 0
        %453 = vmatmul.mubr.bf16.gmra.mrb[0].mxu0 %v312
        %v454 = vpop.f32.mrb[0].mxu0
        %v455 = vadd.f32 %v346, %v454
        %v456 = vpop.f32.mrb[0].mxu0
        %v457 = vpop.f32.mrb[0].mxu0
        %v458 = vadd.f32 %v346, %v457
        %v459 = vpop.f32.mrb[0].mxu0
        %460 = vmatprep.mubr.bf16.mxu0 0
        %461 = vmatmul.mubr.bf16.gmra.mrb[0].mxu0 %v313
        %v462 = vpop.f32.mrb[0].mxu0
        %v463 = vadd.f32 %v346, %v462
        %v464 = vpop.f32.mrb[0].mxu0
        %v465 = vpop.f32.mrb[0].mxu0
        %v466 = vadd.f32 %v346, %v465
        %v467 = vpop.f32.mrb[0].mxu0
        %468 = vmatprep.mubr.bf16.mxu0 0
        %469 = vmatmul.mubr.bf16.gmra.mrb[0].mxu0 %v314
        %v470 = vpop.f32.mrb[0].mxu0
        %v471 = vadd.f32 %v346, %v470
        %v472 = vpop.f32.mrb[0].mxu0
        %v473 = vpop.f32.mrb[0].mxu0
        %v474 = vadd.f32 %v346, %v473
        %v475 = vpop.f32.mrb[0].mxu0
        %476 = vmatprep.mubr.bf16.mxu0 0
        %477 = vmatmul.mubr.bf16.gmra.mrb[0].mxu0 %v315
        %v478 = vpop.f32.mrb[0].mxu0
        %v479 = vadd.f32 %v346, %v478
        %v480 = vpop.f32.mrb[0].mxu0
        %v481 = vpop.f32.mrb[0].mxu0
        %v482 = vadd.f32 %v346, %v481
        %v483 = vpop.f32.mrb[0].mxu0
        %484 = vmatprep.mubr.bf16.mxu0 0
        %485 = vmatmul.mubr.bf16.gmra.mrb[0].mxu0 %v316
        %v486 = vpop.f32.mrb[0].mxu0
        %v487 = vadd.f32 %v346, %v486
        %v488 = vpop.f32.mrb[0].mxu0
        %v489 = vpop.f32.mrb[0].mxu0
        %v490 = vadd.f32 %v346, %v489
        %v491 = vpop.f32.mrb[0].mxu0
        %492 = vmatprep.mubr.bf16.mxu0 0
        %493 = vmatmul.mubr.bf16.gmra.mrb[0].mxu0 %v317
        %v494 = vpop.f32.mrb[0].mxu0
        %v495 = vadd.f32 %v346, %v494
        %v496 = vpop.f32.mrb[0].mxu0
        %v497 = vpop.f32.mrb[0].mxu0
        %v498 = vadd.f32 %v346, %v497
        %v499 = vpop.f32.mrb[0].mxu0
        %500 = vmatprep.mubr.bf16.mxu0 0
        %501 = vmatmul.mubr.bf16.gmra.mrb[0].mxu0 %v318
        %v502 = vpop.f32.mrb[0].mxu0
        %v503 = vadd.f32 %v346, %v502
        %v504 = vpop.f32.mrb[0].mxu0
        %v505 = vpop.f32.mrb[0].mxu0
        %v506 = vadd.f32 %v346, %v505
        %v507 = vpop.f32.mrb[0].mxu0
        %508 = vmatprep.mubr.bf16.mxu0 0
        %509 = vmatmul.mubr.bf16.gmra.mrb[0].mxu0 %v319
        %v510 = vpop.f32.mrb[0].mxu0
        %v511 = vadd.f32 %v346, %v510
        %v512 = vpop.f32.mrb[0].mxu0
        %v513 = vpop.f32.mrb[0].mxu0
        %v514 = vadd.f32 %v346, %v513
        %v515 = vpop.f32.mrb[0].mxu0
        %516 = vmatprep.mubr.bf16.mxu0 0
        %517 = vmatmul.mubr.bf16.gmra.mrb[0].mxu0 %v320
        %v518 = vpop.f32.mrb[0].mxu0
        %v519 = vadd.f32 %v346, %v518
        %v520 = vpop.f32.mrb[0].mxu0
        %v521 = vpop.f32.mrb[0].mxu0
        %v522 = vadd.f32 %v346, %v521
        %v523 = vpop.f32.mrb[0].mxu0
        %524 = vmatprep.mubr.bf16.mxu0 0
        %525 = vmatmul.mubr.bf16.gmra.mrb[0].mxu0 %v321
        %v526 = vpop.f32.mrb[0].mxu0
        %v527 = vadd.f32 %v346, %v526
        %v528 = vpop.f32.mrb[0].mxu0
        %v529 = vpop.f32.mrb[0].mxu0
        %v530 = vadd.f32 %v346, %v529
        %v531 = vpop.f32.mrb[0].mxu0
        %532 = vmatprep.mubr.bf16.mxu0 0
        %533 = vmatmul.mubr.bf16.gmra.mrb[0].mxu0 %v322
        %v534 = vpop.f32.mrb[0].mxu0
        %v535 = vadd.f32 %v346, %v534
        %v536 = vpop.f32.mrb[0].mxu0
        %v537 = vpop.f32.mrb[0].mxu0
        %v538 = vadd.f32 %v346, %v537
        %v539 = vpop.f32.mrb[0].mxu0
        %540 = vmatprep.mubr.bf16.mxu0 0
        %541 = vmatmul.mubr.bf16.gmra.mrb[0].mxu0 %v323
        %v542 = vpop.f32.mrb[0].mxu0
        %v543 = vadd.f32 %v346, %v542
        %v544 = vpop.f32.mrb[0].mxu0
        %v545 = vpop.f32.mrb[0].mxu0
        %v546 = vadd.f32 %v346, %v545
        %v547 = vpop.f32.mrb[0].mxu0
        %548 = vmatprep.mubr.bf16.mxu0 0
        %549 = vmatmul.mubr.bf16.gmra.mrb[0].mxu0 %v324
        %v550 = vpop.f32.mrb[0].mxu0
        %v551 = vadd.f32 %v346, %v550
        %v552 = vpop.f32.mrb[0].mxu0
        %v553 = vpop.f32.mrb[0].mxu0
        %v554 = vadd.f32 %v346, %v553
        %v555 = vpop.f32.mrb[0].mxu0
        %556 = vdwg.mxu0
        %v557 = vmax.f32 %v431, 0.0
        %v558 = vmax.f32 %v434, 0.0
        %v559 = vmax.f32 %v439, 0.0
        %v560 = vmax.f32 %v442, 0.0
        %v561 = vmax.f32 %v447, 0.0
        %v562 = vmax.f32 %v450, 0.0
        %v563 = vmax.f32 %v455, 0.0
        %v564 = vmax.f32 %v458, 0.0
        %v565 = vmax.f32 %v463, 0.0
        %v566 = vmax.f32 %v466, 0.0
        %v567 = vmax.f32 %v471, 0.0
        %v568 = vmax.f32 %v474, 0.0
        %v569 = vmax.f32 %v479, 0.0
        %v570 = vmax.f32 %v482, 0.0
        %v571 = vmax.f32 %v487, 0.0
        %v572 = vmax.f32 %v490, 0.0
        %v573 = vmax.f32 %v495, 0.0
        %v574 = vmax.f32 %v498, 0.0
        %v575 = vmax.f32 %v503, 0.0
        %v576 = vmax.f32 %v506, 0.0
        %v577 = vmax.f32 %v511, 0.0
        %v578 = vmax.f32 %v514, 0.0
        %v579 = vmax.f32 %v519, 0.0
        %v580 = vmax.f32 %v522, 0.0
        %v581 = vmax.f32 %v527, 0.0
        %v582 = vmax.f32 %v530, 0.0
        %v583 = vmax.f32 %v535, 0.0
        %v584 = vmax.f32 %v538, 0.0
        %v585 = vmax.f32 %v543, 0.0
        %v586 = vmax.f32 %v546, 0.0
        %v587 = vmax.f32 %v551, 0.0
        %v588 = vmax.f32 %v554, 0.0
        %v589 = vpack.c.bf16 %v558, %v557
        %v590 = vpack.c.bf16 %v560, %v559
        %v591 = vpack.c.bf16 %v562, %v561
        %v592 = vpack.c.bf16 %v564, %v563
        %v593 = vpack.c.bf16 %v566, %v565
        %v594 = vpack.c.bf16 %v568, %v567
        %v595 = vpack.c.bf16 %v570, %v569
        %v596 = vpack.c.bf16 %v572, %v571
        %v597 = vpack.c.bf16 %v574, %v573
        %v598 = vpack.c.bf16 %v576, %v575
        %v599 = vpack.c.bf16 %v578, %v577
        %v600 = vpack.c.bf16 %v580, %v579
        %v601 = vpack.c.bf16 %v582, %v581
        %v602 = vpack.c.bf16 %v584, %v583
        %v603 = vpack.c.bf16 %v586, %v585
        %v604 = vpack.c.bf16 %v588, %v587
        %v605 = vld [vmem:[#allocation6] sm:$0xf]
        %v606 = vld [vmem:[#allocation6 + $0x4] sm:$0xf]
        %v607 = vld [vmem:[#allocation6 + $0x8] sm:$0xf]
        %v608 = vld [vmem:[#allocation6 + $0xc] sm:$0xf]
        %v609 = vld [vmem:[#allocation6 + $0x10] sm:$0xf]
        %v610 = vld [vmem:[#allocation6 + $0x14] sm:$0xf]
        %v611 = vld [vmem:[#allocation6 + $0x18] sm:$0xf]
        %v612 = vld [vmem:[#allocation6 + $0x1c] sm:$0xf]
        %v613 = vld [vmem:[#allocation6 + $0x20] sm:$0xf]
        %v614 = vld [vmem:[#allocation6 + $0x24] sm:$0xf]
        %v615 = vld [vmem:[#allocation6 + $0x28] sm:$0xf]
        %v616 = vld [vmem:[#allocation6 + $0x2c] sm:$0xf]
        %v617 = vld [vmem:[#allocation6 + $0x30] sm:$0xf]
        %v618 = vld [vmem:[#allocation6 + $0x34] sm:$0xf]
        %v619 = vld [vmem:[#allocation6 + $0x38] sm:$0xf]
        %v620 = vld [vmem:[#allocation6 + $0x3c] sm:$0xf]
        %v621 = vld [vmem:[%s4] sm:$0x1]
        %v623 = vlaneseq
        %v624 = vshrl.u32 %v623, 7
        %v625 = vsub.s32 0, %v624
        %v626 = vrot.slane %v621, %v625
        %v644 = vunpack.c.l.b16 %v605
        %v645 = vunpack.c.l.b16 %v606
        %v646 = vunpack.c.l.b16 %v607
        %v647 = vunpack.c.l.b16 %v608
        %v648 = vunpack.c.l.b16 %v609
        %v649 = vunpack.c.l.b16 %v610
        %v650 = vunpack.c.l.b16 %v611
        %v651 = vunpack.c.l.b16 %v612
        %v652 = vunpack.c.l.b16 %v613
        %v653 = vunpack.c.l.b16 %v614
        %v654 = vunpack.c.l.b16 %v615
        %v655 = vunpack.c.l.b16 %v616
        %v656 = vunpack.c.l.b16 %v617
        %v657 = vunpack.c.l.b16 %v618
        %v658 = vunpack.c.l.b16 %v619
        %v659 = vunpack.c.l.b16 %v620
        %v660 = vpack.c.b16 %v645, %v644
        %v661 = vpack.c.b16 %v647, %v646
        %v662 = vpack.c.b16 %v649, %v648
        %v663 = vpack.c.b16 %v651, %v650
        %v664 = vpack.c.b16 %v653, %v652
        %v665 = vpack.c.b16 %v655, %v654
        %v666 = vpack.c.b16 %v657, %v656
        %v667 = vpack.c.b16 %v659, %v658
        %676 = vmatprep.subr.bf16.mxu0 0
        %677 = vmatpush1.bf16.msra.mxu0 %v660
        %678 = vmatprep.subr.bf16.mxu0 0
        %679 = vmatpush1.bf16.msra.mxu0 %v661
        %680 = vmatprep.subr.bf16.mxu0 0
        %681 = vmatpush1.bf16.msra.mxu0 %v662
        %682 = vmatprep.subr.bf16.mxu0 0
        %683 = vmatpush1.bf16.msra.mxu0 %v663
        %684 = vmatprep.subr.bf16.mxu0 0
        %685 = vmatpush1.bf16.msra.mxu0 %v664
        %686 = vmatprep.subr.bf16.mxu0 0
        %687 = vmatpush1.bf16.msra.mxu0 %v665
        %688 = vmatprep.subr.bf16.mxu0 0
        %689 = vmatpush1.bf16.msra.mxu0 %v666
        %690 = vmatprep.subr.bf16.mxu0 0
        %691 = vmatpush1.bf16.msra.mxu0 %v667
        %692 = vmatprep.subr.bf16.mxu0 0
        %693 = vmatpush1.bf16.msra.mxu0 0
        %694 = vmatprep.subr.bf16.mxu0 0
        %695 = vmatpush1.bf16.msra.mxu0 0
        %696 = vmatprep.subr.bf16.mxu0 0
        %697 = vmatpush1.bf16.msra.mxu0 0
        %698 = vmatprep.subr.bf16.mxu0 0
        %699 = vmatpush1.bf16.msra.mxu0 0
        %700 = vmatprep.subr.bf16.mxu0 0
        %701 = vmatpush1.bf16.msra.mxu0 0
        %702 = vmatprep.subr.bf16.mxu0 0
        %703 = vmatpush1.bf16.msra.mxu0 0
        %704 = vmatprep.subr.bf16.mxu0 0
        %705 = vmatpush1.bf16.msra.mxu0 0
        %706 = vmatprep.subr.bf16.mxu0 0
        %707 = vmatpush1.bf16.msra.mxu0 0
        %708 = vmatprep.mubr.bf16.mxu0 0
        %709 = vmatmul.mubr.bf16.gmra.mrb[0].mxu0 %v589
        %v710 = vpop.f32.mrb[0].mxu0
        %v711 = vadd.f32 %v626, %v710
        %v712 = vpop.f32.mrb[0].mxu0
        %v713 = vpop.f32.mrb[0].mxu0
        %v714 = vadd.f32 %v626, %v713
        %v715 = vpop.f32.mrb[0].mxu0
        %716 = vmatprep.mubr.bf16.mxu0 0
        %717 = vmatmul.mubr.bf16.gmra.mrb[0].mxu0 %v590
        %v718 = vpop.f32.mrb[0].mxu0
        %v719 = vadd.f32 %v626, %v718
        %v720 = vpop.f32.mrb[0].mxu0
        %v721 = vpop.f32.mrb[0].mxu0
        %v722 = vadd.f32 %v626, %v721
        %v723 = vpop.f32.mrb[0].mxu0
        %724 = vmatprep.mubr.bf16.mxu0 0
        %725 = vmatmul.mubr.bf16.gmra.mrb[0].mxu0 %v591
        %v726 = vpop.f32.mrb[0].mxu0
        %v727 = vadd.f32 %v626, %v726
        %v728 = vpop.f32.mrb[0].mxu0
        %v729 = vpop.f32.mrb[0].mxu0
        %v730 = vadd.f32 %v626, %v729
        %v731 = vpop.f32.mrb[0].mxu0
        %732 = vmatprep.mubr.bf16.mxu0 0
        %733 = vmatmul.mubr.bf16.gmra.mrb[0].mxu0 %v592
        %v734 = vpop.f32.mrb[0].mxu0
        %v735 = vadd.f32 %v626, %v734
        %v736 = vpop.f32.mrb[0].mxu0
        %v737 = vpop.f32.mrb[0].mxu0
        %v738 = vadd.f32 %v626, %v737
        %v739 = vpop.f32.mrb[0].mxu0
        %740 = vmatprep.mubr.bf16.mxu0 0
        %741 = vmatmul.mubr.bf16.gmra.mrb[0].mxu0 %v593
        %v742 = vpop.f32.mrb[0].mxu0
        %v743 = vadd.f32 %v626, %v742
        %v744 = vpop.f32.mrb[0].mxu0
        %v745 = vpop.f32.mrb[0].mxu0
        %v746 = vadd.f32 %v626, %v745
        %v747 = vpop.f32.mrb[0].mxu0
        %748 = vmatprep.mubr.bf16.mxu0 0
        %749 = vmatmul.mubr.bf16.gmra.mrb[0].mxu0 %v594
        %v750 = vpop.f32.mrb[0].mxu0
        %v751 = vadd.f32 %v626, %v750
        %v752 = vpop.f32.mrb[0].mxu0
        %v753 = vpop.f32.mrb[0].mxu0
        %v754 = vadd.f32 %v626, %v753
        %v755 = vpop.f32.mrb[0].mxu0
        %756 = vmatprep.mubr.bf16.mxu0 0
        %757 = vmatmul.mubr.bf16.gmra.mrb[0].mxu0 %v595
        %v758 = vpop.f32.mrb[0].mxu0
        %v759 = vadd.f32 %v626, %v758
        %v760 = vpop.f32.mrb[0].mxu0
        %v761 = vpop.f32.mrb[0].mxu0
        %v762 = vadd.f32 %v626, %v761
        %v763 = vpop.f32.mrb[0].mxu0
        %764 = vmatprep.mubr.bf16.mxu0 0
        %765 = vmatmul.mubr.bf16.gmra.mrb[0].mxu0 %v596
        %v766 = vpop.f32.mrb[0].mxu0
        %v767 = vadd.f32 %v626, %v766
        %v768 = vpop.f32.mrb[0].mxu0
        %v769 = vpop.f32.mrb[0].mxu0
        %v770 = vadd.f32 %v626, %v769
        %v771 = vpop.f32.mrb[0].mxu0
        %772 = vmatprep.mubr.bf16.mxu0 0
        %773 = vmatmul.mubr.bf16.gmra.mrb[0].mxu0 %v597
        %v774 = vpop.f32.mrb[0].mxu0
        %v775 = vadd.f32 %v626, %v774
        %v776 = vpop.f32.mrb[0].mxu0
        %v777 = vpop.f32.mrb[0].mxu0
        %v778 = vadd.f32 %v626, %v777
        %v779 = vpop.f32.mrb[0].mxu0
        %780 = vmatprep.mubr.bf16.mxu0 0
        %781 = vmatmul.mubr.bf16.gmra.mrb[0].mxu0 %v598
        %v782 = vpop.f32.mrb[0].mxu0
        %v783 = vadd.f32 %v626, %v782
        %v784 = vpop.f32.mrb[0].mxu0
        %v785 = vpop.f32.mrb[0].mxu0
        %v786 = vadd.f32 %v626, %v785
        %v787 = vpop.f32.mrb[0].mxu0
        %788 = vmatprep.mubr.bf16.mxu0 0
        %789 = vmatmul.mubr.bf16.gmra.mrb[0].mxu0 %v599
        %v790 = vpop.f32.mrb[0].mxu0
        %v791 = vadd.f32 %v626, %v790
        %v792 = vpop.f32.mrb[0].mxu0
        %v793 = vpop.f32.mrb[0].mxu0
        %v794 = vadd.f32 %v626, %v793
        %v795 = vpop.f32.mrb[0].mxu0
        %796 = vmatprep.mubr.bf16.mxu0 0
        %797 = vmatmul.mubr.bf16.gmra.mrb[0].mxu0 %v600
        %v798 = vpop.f32.mrb[0].mxu0
        %v799 = vadd.f32 %v626, %v798
        %v800 = vpop.f32.mrb[0].mxu0
        %v801 = vpop.f32.mrb[0].mxu0
        %v802 = vadd.f32 %v626, %v801
        %v803 = vpop.f32.mrb[0].mxu0
        %804 = vmatprep.mubr.bf16.mxu0 0
        %805 = vmatmul.mubr.bf16.gmra.mrb[0].mxu0 %v601
        %v806 = vpop.f32.mrb[0].mxu0
        %v807 = vadd.f32 %v626, %v806
        %v808 = vpop.f32.mrb[0].mxu0
        %v809 = vpop.f32.mrb[0].mxu0
        %v810 = vadd.f32 %v626, %v809
        %v811 = vpop.f32.mrb[0].mxu0
        %812 = vmatprep.mubr.bf16.mxu0 0
        %813 = vmatmul.mubr.bf16.gmra.mrb[0].mxu0 %v602
        %v814 = vpop.f32.mrb[0].mxu0
        %v815 = vadd.f32 %v626, %v814
        %v816 = vpop.f32.mrb[0].mxu0
        %v817 = vpop.f32.mrb[0].mxu0
        %v818 = vadd.f32 %v626, %v817
        %v819 = vpop.f32.mrb[0].mxu0
        %820 = vmatprep.mubr.bf16.mxu0 0
        %821 = vmatmul.mubr.bf16.gmra.mrb[0].mxu0 %v603
        %v822 = vpop.f32.mrb[0].mxu0
        %v823 = vadd.f32 %v626, %v822
        %v824 = vpop.f32.mrb[0].mxu0
        %v825 = vpop.f32.mrb[0].mxu0
        %v826 = vadd.f32 %v626, %v825
        %v827 = vpop.f32.mrb[0].mxu0
        %828 = vmatprep.mubr.bf16.mxu0 0
        %829 = vmatmul.mubr.bf16.gmra.mrb[0].mxu0 %v604
        %v830 = vpop.f32.mrb[0].mxu0
        %v831 = vadd.f32 %v626, %v830
        %v832 = vpop.f32.mrb[0].mxu0
        %v833 = vpop.f32.mrb[0].mxu0
        %v834 = vadd.f32 %v626, %v833
        %v835 = vpop.f32.mrb[0].mxu0
        %836 = vdwg.mxu0
        %v837 = vpack.c.bf16 %v714, %v711
        %v838 = vpack.c.bf16 %v722, %v719
        %v839 = vpack.c.bf16 %v730, %v727
        %v840 = vpack.c.bf16 %v738, %v735
        %v841 = vpack.c.bf16 %v746, %v743
        %v842 = vpack.c.bf16 %v754, %v751
        %v843 = vpack.c.bf16 %v762, %v759
        %v844 = vpack.c.bf16 %v770, %v767
        %v845 = vpack.c.bf16 %v778, %v775
        %v846 = vpack.c.bf16 %v786, %v783
        %v847 = vpack.c.bf16 %v794, %v791
        %v848 = vpack.c.bf16 %v802, %v799
        %v849 = vpack.c.bf16 %v810, %v807
        %v850 = vpack.c.bf16 %v818, %v815
        %v851 = vpack.c.bf16 %v826, %v823
        %v852 = vpack.c.bf16 %v834, %v831
        %v869 = vunpack.c.l.b16 %v837
        %v870 = vunpack.c.h.b16 %v837
        %v871 = vunpack.c.l.b16 %v838
        %v872 = vunpack.c.h.b16 %v838
        %v873 = vunpack.c.l.b16 %v839
        %v874 = vunpack.c.h.b16 %v839
        %v875 = vunpack.c.l.b16 %v840
        %v876 = vunpack.c.h.b16 %v840
        %v877 = vunpack.c.l.b16 %v841
        %v878 = vunpack.c.h.b16 %v841
        %v879 = vunpack.c.l.b16 %v842
        %v880 = vunpack.c.h.b16 %v842
        %v881 = vunpack.c.l.b16 %v843
        %v882 = vunpack.c.h.b16 %v843
        %v883 = vunpack.c.l.b16 %v844
        %v884 = vunpack.c.h.b16 %v844
        %v885 = vunpack.c.l.b16 %v845
        %v886 = vunpack.c.h.b16 %v845
        %v887 = vunpack.c.l.b16 %v846
        %v888 = vunpack.c.h.b16 %v846
        %v889 = vunpack.c.l.b16 %v847
        %v890 = vunpack.c.h.b16 %v847
        %v891 = vunpack.c.l.b16 %v848
        %v892 = vunpack.c.h.b16 %v848
        %v893 = vunpack.c.l.b16 %v849
        %v894 = vunpack.c.h.b16 %v849
        %v895 = vunpack.c.l.b16 %v850
        %v896 = vunpack.c.h.b16 %v850
        %v897 = vunpack.c.l.b16 %v851
        %v898 = vunpack.c.h.b16 %v851
        %v899 = vunpack.c.l.b16 %v852
        %v900 = vunpack.c.h.b16 %v852
        %v901 = vpack.c.b16 %v869, %v869
        %v902 = vpack.c.b16 %v870, %v870
        %v903 = vpack.c.b16 %v871, %v871
        %v904 = vpack.c.b16 %v872, %v872
        %v905 = vpack.c.b16 %v873, %v873
        %v906 = vpack.c.b16 %v874, %v874
        %v907 = vpack.c.b16 %v875, %v875
        %v908 = vpack.c.b16 %v876, %v876
        %v909 = vpack.c.b16 %v877, %v877
        %v910 = vpack.c.b16 %v878, %v878
        %v911 = vpack.c.b16 %v879, %v879
        %v912 = vpack.c.b16 %v880, %v880
        %v913 = vpack.c.b16 %v881, %v881
        %v914 = vpack.c.b16 %v882, %v882
        %v915 = vpack.c.b16 %v883, %v883
        %v916 = vpack.c.b16 %v884, %v884
        %v917 = vpack.c.b16 %v885, %v885
        %v918 = vpack.c.b16 %v886, %v886
        %v919 = vpack.c.b16 %v887, %v887
        %v920 = vpack.c.b16 %v888, %v888
        %v921 = vpack.c.b16 %v889, %v889
        %v922 = vpack.c.b16 %v890, %v890
        %v923 = vpack.c.b16 %v891, %v891
        %v924 = vpack.c.b16 %v892, %v892
        %v925 = vpack.c.b16 %v893, %v893
        %v926 = vpack.c.b16 %v894, %v894
        %v927 = vpack.c.b16 %v895, %v895
        %v928 = vpack.c.b16 %v896, %v896
        %v929 = vpack.c.b16 %v897, %v897
        %v930 = vpack.c.b16 %v898, %v898
        %v931 = vpack.c.b16 %v899, %v899
        %v932 = vpack.c.b16 %v900, %v900
        %965 = vst [vmem:[%s274] sm:$0xf] %v901
        %966 = vst [vmem:[%s274 + $0x4] sm:$0xf] %v902
        %967 = vst [vmem:[%s274 + $0x8] sm:$0xf] %v903
        %968 = vst [vmem:[%s274 + $0xc] sm:$0xf] %v904
        %969 = vst [vmem:[%s274 + $0x10] sm:$0xf] %v905
        %970 = vst [vmem:[%s274 + $0x14] sm:$0xf] %v906
        %971 = vst [vmem:[%s274 + $0x18] sm:$0xf] %v907
        %972 = vst [vmem:[%s274 + $0x1c] sm:$0xf] %v908
        %973 = vst [vmem:[%s274 + $0x20] sm:$0xf] %v909
        %974 = vst [vmem:[%s274 + $0x24] sm:$0xf] %v910
        %975 = vst [vmem:[%s274 + $0x28] sm:$0xf] %v911
        %976 = vst [vmem:[%s274 + $0x2c] sm:$0xf] %v912
        %977 = vst [vmem:[%s274 + $0x30] sm:$0xf] %v913
        %978 = vst [vmem:[%s274 + $0x34] sm:$0xf] %v914
        %979 = vst [vmem:[%s274 + $0x38] sm:$0xf] %v915
        %980 = vst [vmem:[%s274 + $0x3c] sm:$0xf] %v916
        %981 = vst [vmem:[%s274 + $0x40] sm:$0xf] %v917
        %982 = vst [vmem:[%s274 + $0x44] sm:$0xf] %v918
        %983 = vst [vmem:[%s274 + $0x48] sm:$0xf] %v919
        %984 = vst [vmem:[%s274 + $0x4c] sm:$0xf] %v920
        %985 = vst [vmem:[%s274 + $0x50] sm:$0xf] %v921
        %986 = vst [vmem:[%s274 + $0x54] sm:$0xf] %v922
        %987 = vst [vmem:[%s274 + $0x58] sm:$0xf] %v923
        %988 = vst [vmem:[%s274 + $0x5c] sm:$0xf] %v924
        %989 = vst [vmem:[%s274 + $0x60] sm:$0xf] %v925
        %990 = vst [vmem:[%s274 + $0x64] sm:$0xf] %v926
        %991 = vst [vmem:[%s274 + $0x68] sm:$0xf] %v927
        %992 = vst [vmem:[%s274 + $0x6c] sm:$0xf] %v928
        %993 = vst [vmem:[%s274 + $0x70] sm:$0xf] %v929
        %994 = vst [vmem:[%s274 + $0x74] sm:$0xf] %v930
        %995 = vst [vmem:[%s274 + $0x78] sm:$0xf] %v931
        %996 = vst [vmem:[%s274 + $0x7c] sm:$0xf] %v932
        %s997 = smul.u32 32, %s20
        %p998 = scmp.lt.s32.totalorder %s997, 63
        %s999 = scalar_select %p998, %s997, 63
        %s1000 = smul.addr %s999, 4
        %s1001 = scalar_lea.vmem %s5, %s1000
        // Predicated region
        $region53: #{mlp_forward.1} parent=39 // pred_check
          %p1002 = pneg %p148
        $region54: #{mlp_forward.1} parent=39 // pred_check_branch
          %1004 = sbr.rel (%p1002) target = $region56
        $region55: #{mlp_forward.1} parent=39 // pred_region
          %s1005 = smul.u32 32, %s20
        $region56: #{mlp_forward.1} parent=39 // pred_fallthru
          _
      $region40: #{mlp_forward.1} parent=5 // pred_fallthru
        _
      %p1006 = scmp.le.s32.totalorder 2, %s15
      // Predicated region
      $region57: #{mlp_forward.1} parent=5 // pred_check
        %p1007 = pneg %p1006
      $region58: #{mlp_forward.1} parent=5 // pred_check_branch
        %1009 = sbr.rel (%p1007) target = $region60
      $region59: #{mlp_forward.1} parent=5 // pred_region
        %s1010 = ssub.s32 %s15, 2
        // Predicated region
        $region61: #{mlp_forward.1} parent=59 // pred_check
          %p1011 = pneg %p154
        $region62: #{mlp_forward.1} parent=59 // pred_check_branch
          %1013 = sbr.rel (%p1011) target = $region64
        $region63: #{mlp_forward.1} parent=59 // pred_region
          %s1014 = smul.u32 32, %s21
          %p1015 = scmp.lt.s32.totalorder %s1014, 63
          %s1016 = scalar_select %p1015, %s1014, 63
          %s1017 = smul.addr %s1016, 4
          %s1018 = scalar_lea.vmem %s5, %s1017
        $region64: #{mlp_forward.1} parent=59 // pred_fallthru
          _
      $region60: #{mlp_forward.1} parent=5 // pred_fallthru
        _
    $region6: #{mlp_forward.1} parent=1 // loop_footer
      %s19 = sadd.s32 1, %s15
    $region7: #{mlp_forward.1} parent=1 // loop_footer_branch
      %14 = sbr.rel target = $region3
    $region8: #{mlp_forward.1} parent=1 // loop_exit
      _
    %1019 = vsyncpa [#allocation3], 1
    %s1020 = scalar_lea.sflag [#allocation3], 1
    %1021 = vsyncpa %s1020, 1
    %1022 = vsyncpa [#allocation5], 1

</llo_original>
